<compile_context>
chip_gen: v7x
topology: tpu7x:2x2x1
jax: 0.10.0
libtpu: 0.0.40
codegen_flags: <defaults>
</compile_context>

<pallas_src>
import functools

import jax
import jax.numpy as jnp
from jax.experimental import pallas as pl
from jax.experimental.pallas import tpu as pltpu


_MASK_DTYPE = jnp.int8          # ReLU-derivative mask: only 0/1 used downstream.
_WEIGHT_DTYPE = jnp.bfloat16    # MXU-native weight feed; f32 accumulation.


def _detect_vmem_bytes():
    try:
        info = pltpu.get_tpu_info()
        v = getattr(info, "vmem_capacity_bytes", None)
        if v:
            return int(v)
    except Exception:
        pass
    return 64 * 1024 * 1024     # conservative default (v7x per-TC VMEM)


_TPU_VMEM_BYTES = _detect_vmem_bytes()
# Scoped-VMEM ceiling for pallas_call and the fused-path weight budget,
# derived per chip (v5e/v6e: 128 MiB physical -> ~96/32 MiB; v7x: 64 -> 48/16).
_VMEM_LIMIT = int(min(_TPU_VMEM_BYTES * 3 // 4, 100 * 1024 * 1024))
_FUSE_WEIGHT_BYTES = _VMEM_LIMIT // 3
_BIG_VMEM = _TPU_VMEM_BYTES >= 96 * 1024 * 1024


def _round_up(x, m):
    return (x + m - 1) // m * m


def _pick_tile(dim, prefs):
    for p in prefs:
        if dim >= p and dim % p == 0:
            return p
    return dim  # small / odd dims: one full-extent block


# ----------------------------------------------------------------------------
# Single fused layer: tiled matmul + bias + ReLU (+ residual) (+ ReLU mask)
# ----------------------------------------------------------------------------
def _fc_relu_kernel(*refs, residual, emit_mask, use_scratch):
    """refs: x(tm,tk), wT(tk,tn) bf16, b(1,tn), [res(tm,tn)], o(tm,tn), [mask], [acc]."""
    x_ref, wT_ref, b_ref = refs[0], refs[1], refs[2]
    idx = 3
    res_ref = None
    if residual:
        res_ref = refs[idx]
        idx += 1
    o_ref = refs[idx]
    idx += 1
    mask_ref = None
    if emit_mask:
        mask_ref = refs[idx]
        idx += 1
    # For f32 outputs the output block is grid-resident across k -> accumulate
    # directly into it (no scratch, no final VMEM->VMEM copy).
    acc_ref = refs[idx] if use_scratch else o_ref

    k = pl.program_id(2)

    @pl.when(k == 0)
    def _():
        acc_ref[...] = jnp.zeros_like(acc_ref)

    # bf16 MXU feed; f32 accumulation via preferred_element_type.
    acc_ref[...] += jnp.dot(
        x_ref[...].astype(jnp.bfloat16), wT_ref[...],
        preferred_element_type=jnp.float32).astype(acc_ref.dtype)

    @pl.when(k == pl.num_programs(2) - 1)
    def _():
        z = acc_ref[...].astype(jnp.float32) + b_ref[...].astype(jnp.float32)
        y = jnp.maximum(z, 0.0)
        if residual:
            y = y + res_ref[...].astype(jnp.float32)
        o_ref[...] = y.astype(o_ref.dtype)
        if emit_mask:
            mask_ref[...] = (z >= 0).astype(mask_ref.dtype)


def fc_relu_layer(x, wT_pad, b_pad, d_out, residual=None, emit_mask=False):
    """relu(x @ W.T + b) [+ residual]; optionally also the ReLU mask (z >= 0)."""
    B, d_in = x.shape
    d_in_pad, d_out_pad = wT_pad.shape
    b_dim = _round_up(max(B, 8), 8)

    x_p = x
    if (b_dim, d_in_pad) != (B, d_in):
        # TODO(synk): callers with already lane-aligned shapes skip this; a
        # ragged in-kernel tail (pl.BoundedSlice) would remove the extra HBM pass.
        x_p = jnp.pad(x, ((0, b_dim - B), (0, d_in_pad - d_in)))
    res_p = None
    if residual is not None:
        res_p = residual
        if (b_dim, d_out_pad) != residual.shape:
            res_p = jnp.pad(residual,
                            ((0, b_dim - B), (0, d_out_pad - residual.shape[1])))

    # Bigger batch tiles on 128 MiB-VMEM chips -> less per-tile weight restream.
    if emit_mask:
        tm_prefs = (512, 256, 128, 64, 32) if _BIG_VMEM else (256, 128, 64, 32)
    else:
        tm_prefs = ((512, 256, 128, 64, 32, 16, 8) if _BIG_VMEM
                    else (256, 128, 64, 32, 16, 8))
    tm = _pick_tile(b_dim, tm_prefs)
    tn = _pick_tile(d_out_pad, (256, 128))
    tk = _pick_tile(d_in_pad, (512, 256, 128))
    grid = (b_dim // tm, d_out_pad // tn, d_in_pad // tk)

    out_dtype = x.dtype
    use_scratch = (out_dtype != jnp.float32)

    kernel = functools.partial(_fc_relu_kernel,
                               residual=residual is not None,
                               emit_mask=emit_mask,
                               use_scratch=use_scratch)

    in_specs = [
        pl.BlockSpec((tm, tk), lambda i, j, k: (i, k)),
        pl.BlockSpec((tk, tn), lambda i, j, k: (k, j)),
        pl.BlockSpec((1, tn), lambda i, j, k: (0, j)),
    ]
    args = [x_p, wT_pad, b_pad]
    if residual is not None:
        in_specs.append(pl.BlockSpec((tm, tn), lambda i, j, k: (i, j)))
        args.append(res_p)

    out_shapes = [jax.ShapeDtypeStruct((b_dim, d_out_pad), out_dtype)]
    out_specs = [pl.BlockSpec((tm, tn), lambda i, j, k: (i, j))]
    if emit_mask:
        out_shapes.append(jax.ShapeDtypeStruct((b_dim, d_out_pad), _MASK_DTYPE))
        out_specs.append(pl.BlockSpec((tm, tn), lambda i, j, k: (i, j)))

    scratch_shapes = [pltpu.VMEM((tm, tn), jnp.float32)] if use_scratch else []

    outs = pl.pallas_call(
        kernel,
        out_shape=tuple(out_shapes),
        grid_spec=pltpu.PrefetchScalarGridSpec(
            num_scalar_prefetch=0,
            grid=grid,
            in_specs=in_specs,
            out_specs=tuple(out_specs),
            scratch_shapes=scratch_shapes,
        ),
        compiler_params=pltpu.CompilerParams(
            dimension_semantics=("parallel", "parallel", "arbitrary"),
            vmem_limit_bytes=_VMEM_LIMIT,
        ),
    )(*args)

    y = outs[0][:B, :d_out]
    if emit_mask:
        return y, outs[1][:B, :d_out]
    return y


# ----------------------------------------------------------------------------
# Fused 2-3 layer block ('basic'/'ibn'): chain stays in VMEM, one pallas_call.
# ----------------------------------------------------------------------------
def _fused_block_kernel(x_ref, wT_ref, b_ref, o_ref, mask_ref, *, n_layers, residual):
    x0 = x_ref[...].astype(jnp.float32)
    h = x0
    for l in range(n_layers):
        # bf16 MXU feed, f32 accumulation; h stays f32 between layers.
        z = jnp.dot(h.astype(jnp.bfloat16), wT_ref[l],
                    preferred_element_type=jnp.float32)
        z = z + b_ref[l].astype(jnp.float32)
        mask_ref[l] = (z >= 0).astype(mask_ref.dtype)   # cheap VPU filler under MXU
        h = jnp.maximum(z, 0.0)
    if residual:
        h = h + x0                                      # skip connection = block input
    o_ref[...] = h.astype(o_ref.dtype)


def _fused_block_tm(b_dim, d_pad):
    # Bound live f32 intermediates when the feature dim is large (matters most
    # on v7x's 64 MiB VMEM); otherwise as big as divisibility allows.
    prefs = (128, 64, 32) if d_pad >= 1024 else (256, 128, 64, 32)
    tm = _pick_tile(b_dim, prefs)
    # v7x has 2 TensorCores: make sure the 'parallel' batch axis has >= 2 grid
    # steps when the batch is big enough to split (harmless on 1-TC v5e/v6e,
    # since the weight block index is constant -> no extra weight DMA).
    if tm == b_dim and b_dim >= 64 and (b_dim // 2) % 32 == 0:
        tm = b_dim // 2
    return tm


def fused_fc_relu_block(x, wT_stack, b_stack, d_feat, residual):
    """Chained relu(h @ W_l.T + b_l) [+ x on last]; returns (y, per-layer masks)."""
    B, d_in = x.shape
    n_layers, d_pad, _ = wT_stack.shape
    b_dim = _round_up(max(B, 8), 8)

    x_p = x
    if (b_dim, d_pad) != (B, d_in):
        x_p = jnp.pad(x, ((0, b_dim - B), (0, d_pad - d_in)))

    tm = _fused_block_tm(b_dim, d_pad)
    grid = (b_dim // tm,)

    kernel = functools.partial(_fused_block_kernel, n_layers=n_layers,
                               residual=residual)

    out_shape = (
        jax.ShapeDtypeStruct((b_dim, d_pad), x.dtype),
        jax.ShapeDtypeStruct((n_layers, b_dim, d_pad), _MASK_DTYPE),
    )
    out_specs = (
        pl.BlockSpec((tm, d_pad), lambda i: (i, 0)),
        pl.BlockSpec((n_layers, tm, d_pad), lambda i: (0, i, 0)),
    )

    def _call(single_buffer_weights):
        w_kwargs = {}
        if single_buffer_weights:
            # Weight/bias block index is constant across the grid -> a single
            # buffer suffices; halves the fused path's weight VMEM footprint.
            w_kwargs = dict(pipeline_mode=pl.Buffered(1))
        in_specs = [
            pl.BlockSpec((tm, d_pad), lambda i: (i, 0)),
            pl.BlockSpec((n_layers, d_pad, d_pad), lambda i: (0, 0, 0), **w_kwargs),
            pl.BlockSpec((n_layers, 1, d_pad), lambda i: (0, 0, 0), **w_kwargs),
        ]
        return pl.pallas_call(
            kernel,
            out_shape=out_shape,
            grid_spec=pltpu.PrefetchScalarGridSpec(
                num_scalar_prefetch=0,
                grid=grid,
                in_specs=in_specs,
                out_specs=out_specs,
            ),
            compiler_params=pltpu.CompilerParams(
                dimension_semantics=("parallel",),
                vmem_limit_bytes=_VMEM_LIMIT,
            ),
        )(x_p, wT_stack, b_stack)

    try:
        y_pad, masks_pad = _call(True)
    except Exception:
        # jax/Mosaic version without Buffered(1) support: default double-buffer.
        y_pad, masks_pad = _call(False)

    return y_pad[:B, :d_feat], masks_pad[:, :B, :d_feat]


# ----------------------------------------------------------------------------
# Jacobian / sigma helpers (SVD stays in plain JAX — no Pallas equivalent).
# ----------------------------------------------------------------------------
def _jacobian_from_mask(w, mask):
    """J[i] = W @ diag(mask[i]) — mirrors the torch code (mask scales W's columns)."""
    return w[None, :, :] * mask[:, None, :].astype(w.dtype)


class FcRelu:
    """JAX/Pallas port of fc_relu. Parameters initialised deterministically."""

    def __init__(self, input_dims, out_dims, blk_type, key):
        assert blk_type in ("mlp_blk", "basic", "ibn")
        self.blk_type = blk_type
        self.pathid = -1
        self.input_dims = input_dims
        self.out_dims = out_dims
        n_layers = {"mlp_blk": 1, "basic": 2, "ibn": 3}[blk_type]
        bound = 1.0 / float(input_dims) ** 0.5
        self.params = []
        for _ in range(n_layers):
            key, kw, kb = jax.random.split(key, 3)
            w = jax.random.uniform(kw, (out_dims, input_dims), jnp.float32, -bound, bound)
            b = jax.random.uniform(kb, (out_dims,), jnp.float32, -bound, bound)
            self.params.append((w, b))

        # Pre-transpose + zero-pad + pre-cast weights to bf16 ONCE
        # (no per-forward w.T / pad / cast HBM pass); biases stay f32.
        d_in_pad = _round_up(input_dims, 128)
        d_out_pad = _round_up(out_dims, 128)
        self._wT_pad, self._b_pad = [], []
        for (w, b) in self.params:
            wT = jnp.pad(w.T, ((0, d_in_pad - input_dims), (0, d_out_pad - out_dims)))
            self._wT_pad.append(wT.astype(_WEIGHT_DTYPE))
            self._b_pad.append(jnp.pad(b, (0, d_out_pad - out_dims)).reshape(1, d_out_pad))

        self._use_fused = False
        if blk_type in ("basic", "ibn"):
            assert input_dims == out_dims, "basic/ibn chaining requires square layers"
            self._wT_stack = jnp.stack(self._wT_pad, axis=0)   # (L, Dp, Dp) bf16
            self._b_stack = jnp.stack(self._b_pad, axis=0)     # (L, 1, Dp) f32
            weight_bytes = (n_layers * d_in_pad * d_out_pad
                            * jnp.dtype(_WEIGHT_DTYPE).itemsize)
            self._use_fused = weight_bytes <= _FUSE_WEIGHT_BYTES

    # ----- sigma helpers ------------------------------------------------------
    def _dev(self, x, skip=False):
        # NOTE: mirrors the torch code — mask comes from the layer *input* x.
        w, _ = self.params[0]
        j = _jacobian_from_mask(w, (x >= 0).astype(jnp.float32))
        if skip:
            j = j + jnp.eye(j.shape[-1], dtype=j.dtype)[None]
        return jnp.linalg.svd(j, compute_uv=False)

    def _get_sigma(self, jac, skip):
        if skip:
            jac = jac + jnp.eye(jac.shape[-1], dtype=jac.dtype)[None]
        return jnp.linalg.svd(jac, compute_uv=False)

    # ----- forward ------------------------------------------------------------
    def __call__(self, x, pathid=-1):
        self.pathid = pathid
        if self.blk_type == "mlp_blk":
            w, _ = self.params[0]
            if pathid == -1:
                self.sigma_mean = self._dev(x, skip=True)
                return fc_relu_layer(x, self._wT_pad[0], self._b_pad[0],
                                     self.out_dims, residual=x)
            elif pathid == 0:
                d = self.input_dims
                self.j = jnp.eye(d, dtype=jnp.float32)
                self.sigma_mean = jnp.ones((d,), jnp.float32)
                return x
            elif pathid == 1:
                self.j = _jacobian_from_mask(w, (x >= 0).astype(jnp.float32))
                self.sigma_mean = self._dev(x, skip=False)
                return fc_relu_layer(x, self._wT_pad[0], self._b_pad[0], self.out_dims)
        else:  # 'basic' / 'ibn'
            if pathid != 0:
                if self._use_fused:
                    y, masks = fused_fc_relu_block(
                        x, self._wT_stack, self._b_stack, self.out_dims,
                        residual=(pathid == -1))
                    j = None
                    for l, (w, _) in enumerate(self.params):
                        layer_j = _jacobian_from_mask(w, masks[l].astype(jnp.float32))
                        j = layer_j if j is None else jnp.matmul(j, layer_j)
                else:
                    # Fallback for feature dims too large to keep all weights in VMEM.
                    j = None
                    h = x
                    n = len(self.params)
                    for idx, (w, _) in enumerate(self.params):
                        res = x if (idx == n - 1 and pathid == -1) else None
                        h, mask = fc_relu_layer(h, self._wT_pad[idx], self._b_pad[idx],
                                                self.out_dims, residual=res,
                                                emit_mask=True)
                        layer_j = _jacobian_from_mask(w, mask.astype(jnp.float32))
                        j = layer_j if j is None else jnp.matmul(j, layer_j)
                    y = h
                self.sigma_mean = self._get_sigma(j, skip=(pathid == -1))
                return y  # residual already fused into the kernel
            else:  # pathid == 0
                d = self.input_dims
                self.j = jnp.eye(d, dtype=jnp.float32)
                self.sigma_mean = jnp.ones((d,), jnp.float32)
                return x


if __name__ == "__main__":
    key = jax.random.PRNGKey(0)
    kx, kp1, kp2 = jax.random.split(key, 3)

    B, D = 8, 32  # residual path requires input_dims == out_dims
    x = jax.random.normal(kx, (B, D), jnp.float32)

    # mlp_blk, default path: relu(fc(x)) + x
    blk = FcRelu(D, D, "mlp_blk", kp1)
    y = blk(x, pathid=-1)
    jax.block_until_ready(y)
    w0, b0 = blk.params[0]
    ref = jnp.maximum(x @ w0.T + b0, 0.0) + x
    assert y.shape == (B, D)
    assert jnp.allclose(y, ref, atol=2e-2, rtol=2e-2), "mlp_blk mismatch"

    # mlp_blk, pathid=1: relu(fc(x)), no residual
    y1 = blk(x, pathid=1)
    jax.block_until_ready(y1)
    ref1 = jnp.maximum(x @ w0.T + b0, 0.0)
    assert jnp.allclose(y1, ref1, atol=2e-2, rtol=2e-2), "mlp_blk pathid=1 mismatch"

    # basic block (two fc+ReLU layers fused in one kernel) + residual
    blk2 = FcRelu(D, D, "basic", kp2)
    y2 = blk2(x, pathid=-1)
    jax.block_until_ready(y2)
    h = x
    for (w, b) in blk2.params:
        h = jnp.maximum(h @ w.T + b, 0.0)
    ref2 = h + x
    assert jnp.allclose(y2, ref2, atol=3e-2, rtol=3e-2), "basic mismatch"
    jax.block_until_ready(blk2.sigma_mean)

    # ibn block via the per-layer fallback kernel (path used when D is too big to fuse)
    blk3 = FcRelu(D, D, "ibn", kp2)
    blk3._use_fused = False
    y3 = blk3(x, pathid=-1)
    jax.block_until_ready(y3)
    h = x
    for (w, b) in blk3.params:
        h = jnp.maximum(h @ w.T + b, 0.0)
    ref3 = h + x
    assert jnp.allclose(y3, ref3, atol=3e-2, rtol=3e-2), "ibn fallback mismatch"
    jax.block_until_ready(blk3.sigma_mean)

    print("KERNEL_OK")
</pallas_src>

<mosaic_0001>
module attributes {stable_mosaic.version = 11 : i64} {
  func.func @_fc_relu_kernel(%arg0: i32, %arg1: i32, %arg2: i32, %arg3: memref<8x128xf32, #tpu.memory_space<vmem>>, %arg4: memref<128x128xbf16, #tpu.memory_space<vmem>>, %arg5: memref<1x128xf32, #tpu.memory_space<vmem>>, %arg6: memref<8x128xf32, #tpu.memory_space<vmem>>, %arg7: memref<8x128xf32, #tpu.memory_space<vmem>>) attributes {dimension_semantics = [#tpu.dimension_semantics<parallel>, #tpu.dimension_semantics<parallel>, #tpu.dimension_semantics<arbitrary>], iteration_bounds = array<i64: 1, 1, 1>, scalar_prefetch = 0 : i64, scratch_operands = 0 : i64, tpu.core_type = #tpu.core_type<tc>, window_params = [{transform_indices = @transform_0, window_bounds = array<i64: 8, 128>}, {transform_indices = @transform_1, window_bounds = array<i64: 128, 128>}, {transform_indices = @transform_2, window_bounds = array<i64: 1, 128>}, {transform_indices = @transform_3, window_bounds = array<i64: 8, 128>}, {transform_indices = @transform_4, window_bounds = array<i64: 8, 128>}]} {
    %c0_i32 = arith.constant 0 : i32
    %0 = arith.cmpi eq, %arg2, %c0_i32 : i32
    %1 = arith.extui %0 : i1 to i32
    %c0_i32_0 = arith.constant 0 : i32
    %2 = arith.cmpi ne, %1, %c0_i32_0 : i32
    scf.if %2 {
      %cst_10 = arith.constant 0.000000e+00 : f32
      %13 = vector.broadcast %cst_10 : f32 to vector<8x128xf32>
      %c0_11 = arith.constant 0 : index
      %c0_12 = arith.constant 0 : index
      %14 = vector.load %arg7[%c0_11, %c0_12] : memref<8x128xf32, #tpu.memory_space<vmem>>, vector<8x128xf32>
      tpu.vector_store %arg7[%c0_11, %c0_12], %13 {strides = array<i32>} : memref<8x128xf32, #tpu.memory_space<vmem>>, vector<8x128xf32>,
    } else {
    }
    %c0 = arith.constant 0 : index
    %c0_1 = arith.constant 0 : index
    %3 = vector.load %arg7[%c0, %c0_1] : memref<8x128xf32, #tpu.memory_space<vmem>>, vector<8x128xf32>
    %c0_2 = arith.constant 0 : index
    %c0_3 = arith.constant 0 : index
    %4 = vector.load %arg3[%c0_2, %c0_3] : memref<8x128xf32, #tpu.memory_space<vmem>>, vector<8x128xf32>
    %5 = arith.truncf %4 : vector<8x128xf32> to vector<8x128xbf16>
    %c0_4 = arith.constant 0 : index
    %c0_5 = arith.constant 0 : index
    %6 = vector.load %arg4[%c0_4, %c0_5] : memref<128x128xbf16, #tpu.memory_space<vmem>>, vector<128x128xbf16>
    %cst = arith.constant dense<0.000000e+00> : vector<8x128xf32>
    %7 = tpu.matmul %5, %6, %cst {dimension_numbers = #tpu.dot_dimension_numbers<[1], [0], [0], [1], [0, 0, 1, 1], [], []>} : vector<8x128xbf16>, vector<128x128xbf16>, vector<8x128xf32> -> vector<8x128xf32>
    %8 = arith.addf %3, %7 : vector<8x128xf32>
    %c0_6 = arith.constant 0 : index
    %c0_7 = arith.constant 0 : index
    %9 = vector.load %arg7[%c0_6, %c0_7] : memref<8x128xf32, #tpu.memory_space<vmem>>, vector<8x128xf32>
    tpu.vector_store %arg7[%c0_6, %c0_7], %8 {strides = array<i32>} : memref<8x128xf32, #tpu.memory_space<vmem>>, vector<8x128xf32>,
    %c0_i32_8 = arith.constant 0 : i32
    %10 = arith.cmpi eq, %arg2, %c0_i32_8 : i32
    %11 = arith.extui %10 : i1 to i32
    %c0_i32_9 = arith.constant 0 : i32
    %12 = arith.cmpi ne, %11, %c0_i32_9 : i32
    scf.if %12 {
      %c0_10 = arith.constant 0 : index
      %c0_11 = arith.constant 0 : index
      %13 = vector.load %arg7[%c0_10, %c0_11] : memref<8x128xf32, #tpu.memory_space<vmem>>, vector<8x128xf32>
      %c0_12 = arith.constant 0 : index
      %c0_13 = arith.constant 0 : index
      %14 = vector.load %arg5[%c0_12, %c0_13] : memref<1x128xf32, #tpu.memory_space<vmem>>, vector<1x128xf32>
      %15 = vector.broadcast %14 : vector<1x128xf32> to vector<8x128xf32>
      %16 = arith.addf %13, %15 : vector<8x128xf32>
      %cst_14 = arith.constant 0.000000e+00 : f32
      %17 = vector.broadcast %cst_14 : f32 to vector<8x128xf32>
      %18 = arith.maximumf %16, %17 : vector<8x128xf32>
      %c0_15 = arith.constant 0 : index
      %c0_16 = arith.constant 0 : index
      %19 = vector.load %arg6[%c0_15, %c0_16] : memref<8x128xf32, #tpu.memory_space<vmem>>, vector<8x128xf32>
      %20 = arith.addf %18, %19 : vector<8x128xf32>
      %c0_17 = arith.constant 0 : index
      %c0_18 = arith.constant 0 : index
      %21 = vector.load %arg7[%c0_17, %c0_18] : memref<8x128xf32, #tpu.memory_space<vmem>>, vector<8x128xf32>
      tpu.vector_store %arg7[%c0_17, %c0_18], %20 {strides = array<i32>} : memref<8x128xf32, #tpu.memory_space<vmem>>, vector<8x128xf32>,
    } else {
    }
    return
  }
  func.func @transform_0(%arg0: i32, %arg1: i32, %arg2: i32) -> (i32, i32) {
    %c0_i32 = arith.constant 0 : i32
    return %arg0, %arg2 : i32, i32
  }
  func.func @transform_1(%arg0: i32, %arg1: i32, %arg2: i32) -> (i32, i32) {
    %c0_i32 = arith.constant 0 : i32
    return %arg2, %arg1 : i32, i32
  }
  func.func @transform_2(%arg0: i32, %arg1: i32, %arg2: i32) -> (i32, i32) {
    %c0_i32 = arith.constant 0 : i32
    %c0_i32_0 = arith.constant 0 : i32
    return %c0_i32, %arg1 : i32, i32
  }
  func.func @transform_3(%arg0: i32, %arg1: i32, %arg2: i32) -> (i32, i32) {
    %c0_i32 = arith.constant 0 : i32
    return %arg0, %arg1 : i32, i32
  }
  func.func @transform_4(%arg0: i32, %arg1: i32, %arg2: i32) -> (i32, i32) {
    %c0_i32 = arith.constant 0 : i32
    return %arg0, %arg1 : i32, i32
  }
}

</mosaic_0001>

<llo_original>
// kernel: tpu_custom_call.1
$region0: #{tpu_custom_call.1}
  #allocation0 [shape = 'u32[]', space=smem, size = 0x4, offset = 0x4, fixed_abs, tag = 'smem constant byte address 0x4 - core index']
  #allocation1 [shape = 'u32[144,128]{1,0:T(1,128)}', space=vmem, size = 0x12000, scoped, tag = 'internal scratch']
  %s0 = inlined_call_operand.hbm [shape: f32[8,128], index: 0, kind: input, shape index: {}]
  %s1 = inlined_call_operand.hbm [shape: bf16[128,128], index: 1, kind: input, shape index: {}]
  %s2 = inlined_call_operand.vmem [shape: f32[1,128], index: 2, kind: input, shape index: {}]
  %s3 = inlined_call_operand.vmem [shape: f32[8,128], index: 3, kind: input, shape index: {}]
  %s4 = inlined_call_operand.hbm [shape: f32[8,128], index: 4, kind: output, shape index: {}]
  %s5 = sld [smem:[#allocation0]]
  $region42: #{tpu_custom_call.1} parent=0
    _
  %s7 = ssub.s32 1, %s5
  %s8 = scalar_select 0, %s7, %s5
  $region1: #{tpu_custom_call.1} parent=0
    #allocation2 [shape = 'u8[4096]{0}', space=vmem, size = 0x1000, scoped, tag = 'input window, operand 0, single buffered']
    #allocation3 [shape = 's32[1]{0}', space=sflag, size = 0x4, scoped, tag = 'scoped memory for tpu_custom_call.1']
    #allocation4 [shape = 's32[1]{0}', space=sflag, size = 0x4, scoped, tag = 'scoped memory for tpu_custom_call.1']
    #allocation5 [shape = 'u8[32768]{0}', space=vmem, size = 0x8000, scoped, tag = 'input window, operand 1, single buffered']
    #allocation6 [shape = 's32[1]{0}', space=sflag, size = 0x4, scoped, tag = 'scoped memory for tpu_custom_call.1']
    #allocation7 [shape = 'u8[4096]{0}', space=vmem, size = 0x1000, scoped, tag = 'output window, operand 0, single buffered']
    %9 = vsyncpa [#allocation3], 0
    %10 = vsyncpa [#allocation6], 0
    %11 = vsyncpa [#allocation4], 0
    // Predicated region
    $region2: #{tpu_custom_call.1} parent=1 // pred_check
      _
    $region3: #{tpu_custom_call.1} parent=1 // pred_check_branch
      %13 = sbr.rel (0) target = $region5
    $region4: #{tpu_custom_call.1} parent=1 // pred_region
      %s15 = ssub.s32 128, 128
      %16 = vsyncadd [#allocation3], %s15
      %s18 = sshll.u32 [#allocation2], 4
      %s19 = int_to_ptr.vmem [resolvable:$true] %s18
      %21 = dma.hbm_to_vmem [thread:$0]  %s0, 128, %s19, [#allocation3]
    $region5: #{tpu_custom_call.1} parent=1 // pred_fallthru
      _
    // Predicated region
    $region6: #{tpu_custom_call.1} parent=1 // pred_check
      _
    $region7: #{tpu_custom_call.1} parent=1 // pred_check_branch
      %23 = sbr.rel (0) target = $region9
    $region8: #{tpu_custom_call.1} parent=1 // pred_region
      %s25 = ssub.s32 1024, 1024
      %26 = vsyncadd [#allocation6], %s25
      %s27 = sshll.u32 [#allocation5], 4
      %s28 = int_to_ptr.vmem [resolvable:$true] %s27
      %33 = dma.hbm_to_vmem [thread:$0]  %s1, 1024, %s28, [#allocation6], 64, 64, 4
    $region9: #{tpu_custom_call.1} parent=1 // pred_fallthru
      _
    // Predicated region
    $region10: #{tpu_custom_call.1} parent=1 // pred_check
      _
    $region11: #{tpu_custom_call.1} parent=1 // pred_check_branch
      %35 = sbr.rel (0) target = $region13
    $region12: #{tpu_custom_call.1} parent=1 // pred_region
      _
    $region13: #{tpu_custom_call.1} parent=1 // pred_fallthru
      _
    // Predicated region
    $region14: #{tpu_custom_call.1} parent=1 // pred_check
      _
    $region15: #{tpu_custom_call.1} parent=1 // pred_check_branch
      %37 = sbr.rel (0) target = $region17
    $region16: #{tpu_custom_call.1} parent=1 // pred_region
      _
    $region17: #{tpu_custom_call.1} parent=1 // pred_fallthru
      _
    // Predicated region
    $region18: #{tpu_custom_call.1} parent=1 // pred_check
      _
    $region19: #{tpu_custom_call.1} parent=1 // pred_check_branch
      %39 = sbr.rel (0) target = $region21
    $region20: #{tpu_custom_call.1} parent=1 // pred_region
      %40 = dma.done [#allocation3], 128
    $region21: #{tpu_custom_call.1} parent=1 // pred_fallthru
      _
    // Predicated region
    $region22: #{tpu_custom_call.1} parent=1 // pred_check
      _
    $region23: #{tpu_custom_call.1} parent=1 // pred_check_branch
      %42 = sbr.rel (0) target = $region25
    $region24: #{tpu_custom_call.1} parent=1 // pred_region
      %43 = dma.done [#allocation6], 1024
    $region25: #{tpu_custom_call.1} parent=1 // pred_fallthru
      _
    %p45 = scmp.eq.s32.totalorder 0, 0
    // Predicated region
    $region26: #{tpu_custom_call.1} parent=1 // pred_check
      %p46 = pneg %p45
    $region27: #{tpu_custom_call.1} parent=1 // pred_check_branch
      %48 = sbr.rel (%p46) target = $region29
    $region28: #{tpu_custom_call.1} parent=1 // pred_region
      %49 = vst [vmem:[#allocation7] sm:$0xff] 0.0
    $region29: #{tpu_custom_call.1} parent=1 // pred_fallthru
      _
    %v50 = vld [vmem:[#allocation7] sm:$0xff]
    %v51 = vld [vmem:[#allocation2] sm:$0xff]
    %v52 = vpack.c.bf16 %v51, %v51
    %v53 = vld [vmem:[#allocation5] sm:$0xf]
    %v54 = vld [vmem:[#allocation5 + $0x4] sm:$0xf]
    %v55 = vld [vmem:[#allocation5 + $0x8] sm:$0xf]
    %v56 = vld [vmem:[#allocation5 + $0xc] sm:$0xf]
    %v57 = vld [vmem:[#allocation5 + $0x10] sm:$0xf]
    %v58 = vld [vmem:[#allocation5 + $0x14] sm:$0xf]
    %v59 = vld [vmem:[#allocation5 + $0x18] sm:$0xf]
    %v60 = vld [vmem:[#allocation5 + $0x1c] sm:$0xf]
    %v61 = vld [vmem:[#allocation5 + $0x20] sm:$0xf]
    %v62 = vld [vmem:[#allocation5 + $0x24] sm:$0xf]
    %v63 = vld [vmem:[#allocation5 + $0x28] sm:$0xf]
    %v64 = vld [vmem:[#allocation5 + $0x2c] sm:$0xf]
    %v65 = vld [vmem:[#allocation5 + $0x30] sm:$0xf]
    %v66 = vld [vmem:[#allocation5 + $0x34] sm:$0xf]
    %v67 = vld [vmem:[#allocation5 + $0x38] sm:$0xf]
    %v68 = vld [vmem:[#allocation5 + $0x3c] sm:$0xf]
    %v85 = vunpack.c.l.b16 %v53
    %v86 = vunpack.c.l.b16 %v54
    %v87 = vunpack.c.l.b16 %v55
    %v88 = vunpack.c.l.b16 %v56
    %v89 = vunpack.c.l.b16 %v57
    %v90 = vunpack.c.l.b16 %v58
    %v91 = vunpack.c.l.b16 %v59
    %v92 = vunpack.c.l.b16 %v60
    %v93 = vunpack.c.l.b16 %v61
    %v94 = vunpack.c.l.b16 %v62
    %v95 = vunpack.c.l.b16 %v63
    %v96 = vunpack.c.l.b16 %v64
    %v97 = vunpack.c.l.b16 %v65
    %v98 = vunpack.c.l.b16 %v66
    %v99 = vunpack.c.l.b16 %v67
    %v100 = vunpack.c.l.b16 %v68
    %v101 = vpack.c.b16 %v86, %v85
    %v102 = vpack.c.b16 %v88, %v87
    %v103 = vpack.c.b16 %v90, %v89
    %v104 = vpack.c.b16 %v92, %v91
    %v105 = vpack.c.b16 %v94, %v93
    %v106 = vpack.c.b16 %v96, %v95
    %v107 = vpack.c.b16 %v98, %v97
    %v108 = vpack.c.b16 %v100, %v99
    %117 = vmatprep.subr.bf16.mxu0 0
    %118 = vmatpush1.bf16.msra.mxu0 %v101
    %119 = vmatprep.subr.bf16.mxu0 0
    %120 = vmatpush1.bf16.msra.mxu0 %v102
    %121 = vmatprep.subr.bf16.mxu0 0
    %122 = vmatpush1.bf16.msra.mxu0 %v103
    %123 = vmatprep.subr.bf16.mxu0 0
    %124 = vmatpush1.bf16.msra.mxu0 %v104
    %125 = vmatprep.subr.bf16.mxu0 0
    %126 = vmatpush1.bf16.msra.mxu0 %v105
    %127 = vmatprep.subr.bf16.mxu0 0
    %128 = vmatpush1.bf16.msra.mxu0 %v106
    %129 = vmatprep.subr.bf16.mxu0 0
    %130 = vmatpush1.bf16.msra.mxu0 %v107
    %131 = vmatprep.subr.bf16.mxu0 0
    %132 = vmatpush1.bf16.msra.mxu0 %v108
    %133 = vmatprep.subr.bf16.mxu0 0
    %134 = vmatpush1.bf16.msra.mxu0 0
    %135 = vmatprep.subr.bf16.mxu0 0
    %136 = vmatpush1.bf16.msra.mxu0 0
    %137 = vmatprep.subr.bf16.mxu0 0
    %138 = vmatpush1.bf16.msra.mxu0 0
    %139 = vmatprep.subr.bf16.mxu0 0
    %140 = vmatpush1.bf16.msra.mxu0 0
    %141 = vmatprep.subr.bf16.mxu0 0
    %142 = vmatpush1.bf16.msra.mxu0 0
    %143 = vmatprep.subr.bf16.mxu0 0
    %144 = vmatpush1.bf16.msra.mxu0 0
    %145 = vmatprep.subr.bf16.mxu0 0
    %146 = vmatpush1.bf16.msra.mxu0 0
    %147 = vmatprep.subr.bf16.mxu0 0
    %148 = vmatpush1.bf16.msra.mxu0 0
    %149 = vmatprep.mubr.bf16.mxu0 0
    %150 = vmatmul.mubr.bf16.gmra.mrb[0].mxu0 %v52
    %v151 = vpop.f32.mrb[0].mxu0
    %v152 = vadd.f32 0.0, %v151
    %v153 = vpop.f32.mrb[0].mxu0
    %v154 = vpop.f32.mrb[0].mxu0
    %v155 = vpop.f32.mrb[0].mxu0
    %156 = vdwg.mxu0
    %v157 = vadd.f32 %v50, %v152
    %158 = vst [vmem:[#allocation7] sm:$0xff] %v157
    // Predicated region
    $region30: #{tpu_custom_call.1} parent=1 // pred_check
      %p159 = pneg %p45
    $region31: #{tpu_custom_call.1} parent=1 // pred_check_branch
      %161 = sbr.rel (%p159) target = $region33
    $region32: #{tpu_custom_call.1} parent=1 // pred_region
      %v162 = vld [vmem:[#allocation7] sm:$0xff]
      %v163 = vld [vmem:[%s2] sm:$0x1]
      %v165 = vlaneseq
      %v166 = vshrl.u32 %v165, 7
      %v167 = vsub.s32 0, %v166
      %v168 = vrot.slane %v163, %v167
      %v170 = vadd.f32 %v162, %v168
      %v171 = vmax.f32 %v170, 0.0
      %v172 = vld [vmem:[%s3] sm:$0xff]
      %v173 = vadd.f32 %v171, %v172
      %174 = vst [vmem:[#allocation7] sm:$0xff] %v173
    $region33: #{tpu_custom_call.1} parent=1 // pred_fallthru
      _
    // Predicated region
    $region34: #{tpu_custom_call.1} parent=1 // pred_check
      _
    $region35: #{tpu_custom_call.1} parent=1 // pred_check_branch
      %176 = sbr.rel (0) target = $region37
    $region36: #{tpu_custom_call.1} parent=1 // pred_region
      %s178 = ssub.s32 128, 128
      %179 = vsyncadd [#allocation4], %s178
      %s181 = sshll.u32 [#allocation7], 4
      %s182 = int_to_ptr.vmem [resolvable:$true] %s181
      %184 = dma.vmem_to_hbm [thread:$0]  %s182, 128, %s4, [#allocation4]
    $region37: #{tpu_custom_call.1} parent=1 // pred_fallthru
      _
    // Predicated region
    $region38: #{tpu_custom_call.1} parent=1 // pred_check
      _
    $region39: #{tpu_custom_call.1} parent=1 // pred_check_branch
      %186 = sbr.rel (0) target = $region41
    $region40: #{tpu_custom_call.1} parent=1 // pred_region
      %187 = dma.done [#allocation4], 128
    $region41: #{tpu_custom_call.1} parent=1 // pred_fallthru
      _
    %188 = vsyncpa [#allocation3], 1
    %189 = vsyncpa [#allocation6], 1
    %190 = vsyncpa [#allocation4], 1

</llo_original>
